<compile_context>
chip_gen: v5e
topology: v5e:2x2
jax: 0.10.0
libtpu: 0.0.40
codegen_flags: <defaults>
</compile_context>

<pallas_src>
import jax
import jax.numpy as jnp
from jax.experimental import pallas as pl
from jax.experimental.pallas import tpu as pltpu

_LANE = 128
_MAX_LANES = 8192
_SMALL_BYTES = 256 * 1024      # below this: one block, pipelining not worth it
_MIN_STEPS = 4                 # keep DMA-in / compute / DMA-out overlapped


def _zero_layer_kernel(x_ref, o_ref):
    x = x_ref[...]
    # input[input < 0] = 0  (NaNs and -0.0 preserved, like the PyTorch masked assign).
    o_ref[...] = jnp.where(x < 0, jnp.zeros((), dtype=x.dtype), x)


def _choose_lanes(n: int):
    """Widest power-of-two lane dim (multiple of 128, <= 8192) dividing n, or None."""
    c = _MAX_LANES
    while c >= _LANE:
        if n % c == 0:
            return c
        c //= 2
    return None


def _target_block_bytes() -> int:
    """Per-generation block size. Live VMEM ~= 4x this (double-buffered in + out)."""
    try:
        kind = jax.devices()[0].device_kind.lower()
    except Exception:
        return 2 * 1024 * 1024
    if "7" in kind:            # v7x: 3.2 TB/s HBM, 32 MiB scoped default -> 24 MiB live
        return 6 * 1024 * 1024
    if "v6" in kind:           # v6e: 32 MiB scoped default -> 16 MiB live
        return 4 * 1024 * 1024
    return 2 * 1024 * 1024     # v5e / unknown: 16 MiB scoped default -> 8 MiB live


def zero_layer(x: jax.Array, *, donate: bool = False) -> jax.Array:
    """Zeroes all negative elements of x, preserving shape/dtype.

    donate=True aliases the output onto the input buffer (mirrors the PyTorch
    in-place update). Only set it when the caller actually donates x; otherwise
    XLA inserts a defensive full copy of the input before the kernel.
    """
    orig_shape = x.shape
    dtype = x.dtype
    n = x.size
    if n == 0:
        return x

    lanes = _choose_lanes(n)
    if lanes is None:
        # Ragged size: pad+slice around the kernel would add two extra full HBM
        # passes, so the XLA-fused elementwise op is strictly better here.
        return jnp.where(x < 0, jnp.zeros((), dtype=dtype), x)

    rows = n // lanes
    x2d = jnp.ravel(x).reshape(rows, lanes)   # free, layout-preserving reshape

    itemsize = jnp.dtype(dtype).itemsize
    # Sublane alignment for the second-to-last block dim:
    # 8 for 32-bit, 16 for 16-bit, 32 for 8-bit dtypes.
    sub_align = 8 * max(1, 4 // max(1, itemsize))
    total_bytes = n * itemsize

    if total_bytes <= _SMALL_BYTES or rows <= sub_align:
        block_rows = rows                    # full extent: (8,128) rule waived
        grid = (1,)
    else:
        row_bytes = itemsize * lanes
        block_rows = max(sub_align,
                         (_target_block_bytes() // row_bytes) // sub_align * sub_align)
        steps = pl.cdiv(rows, block_rows)
        if steps < _MIN_STEPS:
            block_rows = max(sub_align, (rows // _MIN_STEPS) // sub_align * sub_align)
            steps = pl.cdiv(rows, block_rows)
        # Prefer an even step count so a 2-TensorCore (v7x) split stays balanced.
        if steps > 1 and steps % 2 == 1:
            cand = -(-rows // (steps + 1))                 # ceil(rows / (steps+1))
            cand = -(-cand // sub_align) * sub_align       # round up to alignment
            if pl.cdiv(rows, cand) % 2 == 0:
                block_rows = cand
                steps = pl.cdiv(rows, cand)
        grid = (steps,)                      # ragged trailing tile is benign (elementwise)

    call_kwargs = {}
    if donate:
        call_kwargs["input_output_aliases"] = {0: 0}

    out2d = pl.pallas_call(
        _zero_layer_kernel,
        out_shape=jax.ShapeDtypeStruct((rows, lanes), dtype),
        grid_spec=pltpu.PrefetchScalarGridSpec(
            num_scalar_prefetch=0,
            grid=grid,
            in_specs=[pl.BlockSpec((block_rows, lanes), lambda i: (i, 0))],
            out_specs=pl.BlockSpec((block_rows, lanes), lambda i: (i, 0)),
        ),
        compiler_params=pltpu.CompilerParams(
            # TODO(synk): evaluate pltpu.CORE_PARALLEL / pl.core_map on v7x for an
            # explicit 2-TC split; plain "parallel" is the safe default everywhere.
            dimension_semantics=("parallel",),
        ),
        cost_estimate=pl.CostEstimate(
            flops=n, transcendentals=0, bytes_accessed=2 * n * itemsize),
        **call_kwargs,
    )(x2d)

    return out2d.reshape(orig_shape)


if __name__ == "__main__":
    key = jax.random.PRNGKey(0)

    # Small NCHW-shaped input consistent with the module acting on conv activations.
    x = jax.random.normal(key, (2, 4, 16, 16), dtype=jnp.float32)
    y = jax.block_until_ready(zero_layer(x))
    ref = jnp.where(x < 0, 0.0, x)
    assert y.shape == x.shape and y.dtype == x.dtype
    assert bool(jnp.all(y == ref))
    assert bool(jnp.all(y >= 0))

    # Extra coverage: a ragged size (fused fallback path) and a multi-step
    # pipelined grid with a ragged trailing tile.
    for shape in [(2, 3, 17, 19), (8, 16, 33, 128)]:
        key, sub = jax.random.split(key)
        xi = jax.random.normal(sub, shape, dtype=jnp.float32)
        yi = jax.block_until_ready(zero_layer(xi))
        assert yi.shape == xi.shape and yi.dtype == xi.dtype
        assert bool(jnp.all(yi == jnp.where(xi < 0, 0.0, xi)))

    print("KERNEL_OK")
</pallas_src>

<mosaic_0001>
module attributes {stable_mosaic.version = 11 : i64} {
  func.func @_zero_layer_kernel(%arg0: i32, %arg1: memref<1x2048xf32, #tpu.memory_space<vmem>>, %arg2: memref<1x2048xf32, #tpu.memory_space<vmem>>) attributes {dimension_semantics = [#tpu.dimension_semantics<parallel>], iteration_bounds = array<i64: 1>, scalar_prefetch = 0 : i64, scratch_operands = 0 : i64, tpu.core_type = #tpu.core_type<tc>, window_params = [{transform_indices = @transform_0, window_bounds = array<i64: 1, 2048>}, {transform_indices = @transform_1, window_bounds = array<i64: 1, 2048>}]} {
    %c0 = arith.constant 0 : index
    %c0_0 = arith.constant 0 : index
    %0 = vector.load %arg1[%c0, %c0_0] : memref<1x2048xf32, #tpu.memory_space<vmem>>, vector<1x2048xf32>
    %cst = arith.constant 0.000000e+00 : f32
    %1 = vector.broadcast %cst : f32 to vector<1x2048xf32>
    %2 = arith.cmpf olt, %0, %1 : vector<1x2048xf32>
    %cst_1 = arith.constant 0.000000e+00 : f32
    %3 = vector.broadcast %cst_1 : f32 to vector<1x2048xf32>
    %4 = arith.select %2, %3, %0 : vector<1x2048xi1>, vector<1x2048xf32>
    %c0_2 = arith.constant 0 : index
    %c0_3 = arith.constant 0 : index
    %5 = vector.load %arg2[%c0_2, %c0_3] : memref<1x2048xf32, #tpu.memory_space<vmem>>, vector<1x2048xf32>
    tpu.vector_store %arg2[%c0_2, %c0_3], %4 {strides = array<i32>} : memref<1x2048xf32, #tpu.memory_space<vmem>>, vector<1x2048xf32>,
    return
  }
  func.func @transform_0(%arg0: i32) -> (i32, i32) {
    %c0_i32 = arith.constant 0 : i32
    %c0_i32_0 = arith.constant 0 : i32
    return %arg0, %c0_i32 : i32, i32
  }
  func.func @transform_1(%arg0: i32) -> (i32, i32) {
    %c0_i32 = arith.constant 0 : i32
    %c0_i32_0 = arith.constant 0 : i32
    return %arg0, %c0_i32 : i32, i32
  }
}

</mosaic_0001>

<llo_original>
// kernel: tpu_custom_call.1
$region0: #{tpu_custom_call.1}
  #allocation0 [shape = 'u32[]', space=smem, size = 0x4, offset = 0x4, fixed_abs, tag = 'smem constant byte address 0x4 - core index']
  #allocation1 [shape = 'u32[72,128]{1,0:T(1,128)}', space=vmem, size = 0x9000, scoped, tag = 'internal scratch']
  %s0 = inlined_call_operand.hbm [shape: f32[1,2048], index: 0, kind: input, shape index: {}]
  %s1 = inlined_call_operand.hbm [shape: f32[1,2048], index: 1, kind: output, shape index: {}]
  %s2 = sld [smem:[#allocation0]]
  $region18: #{tpu_custom_call.1} parent=0
    _
  %s4 = ssub.s32 1, %s2
  %s5 = scalar_select 0, %s4, %s2
  $region1: #{tpu_custom_call.1} parent=0
    #allocation2 [shape = 'u8[8192]{0}', space=vmem, size = 0x2000, scoped, tag = 'input window, operand 0, single buffered']
    #allocation3 [shape = 's32[1]{0}', space=sflag, size = 0x4, scoped, tag = 'scoped memory for tpu_custom_call.1']
    #allocation4 [shape = 's32[1]{0}', space=sflag, size = 0x4, scoped, tag = 'scoped memory for tpu_custom_call.1']
    #allocation5 [shape = 'u8[8192]{0}', space=vmem, size = 0x2000, scoped, tag = 'output window, operand 0, single buffered']
    %6 = vsyncpa [#allocation3], 0
    %7 = vsyncpa [#allocation4], 0
    // Predicated region
    $region2: #{tpu_custom_call.1} parent=1 // pred_check
      _
    $region3: #{tpu_custom_call.1} parent=1 // pred_check_branch
      %9 = sbr.rel (0) target = $region5
    $region4: #{tpu_custom_call.1} parent=1 // pred_region
      %11 = vsyncadd [#allocation3], 0
      %s13 = sshll.u32 %s0, 4
      %s14 = int_to_ptr.hbm [resolvable:$true] %s13
      %s15 = sshll.u32 [#allocation2], 4
      %s16 = int_to_ptr.vmem [resolvable:$true] %s15
      %18 = dma.hbm_to_vmem [thread:$0]  %s14, 256, %s16, [#allocation3]
    $region5: #{tpu_custom_call.1} parent=1 // pred_fallthru
      _
    // Predicated region
    $region6: #{tpu_custom_call.1} parent=1 // pred_check
      _
    $region7: #{tpu_custom_call.1} parent=1 // pred_check_branch
      %20 = sbr.rel (0) target = $region9
    $region8: #{tpu_custom_call.1} parent=1 // pred_region
      %22 = dma.done [#allocation3], 256
    $region9: #{tpu_custom_call.1} parent=1 // pred_fallthru
      _
    %v23 = vld [vmem:[#allocation2] sm:$0xff]
    %v24 = vld [vmem:[#allocation2 + $0x8] sm:$0xff]
    %vm25 = vcmp.lt.f32.partialorder %v23, 0.0
    %vm26 = vcmp.lt.f32.partialorder %v24, 0.0
    %v27 = vsel %vm25, 0.0, %v23
    %v28 = vsel %vm26, 0.0, %v24
    %29 = vst [vmem:[#allocation5] sm:$0xff] %v27
    %30 = vst [vmem:[#allocation5 + $0x8] sm:$0xff] %v28
    // Predicated region
    $region10: #{tpu_custom_call.1} parent=1 // pred_check
      _
    $region11: #{tpu_custom_call.1} parent=1 // pred_check_branch
      %32 = sbr.rel (0) target = $region13
    $region12: #{tpu_custom_call.1} parent=1 // pred_region
      %34 = vsyncadd [#allocation4], 0
      %s36 = sshll.u32 [#allocation5], 4
      %s37 = int_to_ptr.vmem [resolvable:$true] %s36
      %s38 = sshll.u32 %s1, 4
      %s39 = int_to_ptr.hbm [resolvable:$true] %s38
      %41 = dma.vmem_to_hbm [thread:$0]  %s37, 256, %s39, [#allocation4]
    $region13: #{tpu_custom_call.1} parent=1 // pred_fallthru
      _
    // Predicated region
    $region14: #{tpu_custom_call.1} parent=1 // pred_check
      _
    $region15: #{tpu_custom_call.1} parent=1 // pred_check_branch
      %43 = sbr.rel (0) target = $region17
    $region16: #{tpu_custom_call.1} parent=1 // pred_region
      %45 = dma.done [#allocation4], 256
    $region17: #{tpu_custom_call.1} parent=1 // pred_fallthru
      _
    %46 = vsyncpa [#allocation3], 1
    %47 = vsyncpa [#allocation4], 1

</llo_original>
